<compile_context>
chip_gen: v6e
topology: v6e:2x2x1
jax: 0.10.0
libtpu: 0.0.40
codegen_flags: <defaults>
</compile_context>

<pallas_src>
import functools
import math

import jax
import jax.numpy as jnp
from jax.experimental import pallas as pl
from jax.experimental.pallas import tpu as pltpu

LANE = 128
_LOG_EPS = math.log(1e-8)


def _make_int_pow(exponent):
    """Return a function computing x**exponent with VPU multiplies when the exponent
    is a small non-negative integer (exponentiation by squaring); otherwise fall back
    to jnp.power (EUP exp/log)."""
    e = float(exponent)
    if e.is_integer() and 0 <= e <= 64:
        n = int(e)
        if n == 0:
            return lambda x: jnp.ones_like(x)

        def powfn(x, n=n):
            result = None
            base = x
            m = n
            while m:
                if m & 1:
                    result = base if result is None else result * base
                m >>= 1
                if m:
                    base = base * base
            return result

        return powfn
    return lambda x: jnp.power(x, e)


def _focal_loss_kernel(*refs, smooth, pow_a, pow_b, has_w, has_m, need_denom):
    # refs layout: pred, gt, [weight], [mask], rowsum_out, denom_out, rowsum_acc, denom_acc
    pred_ref, gt_ref = refs[0], refs[1]
    idx = 2
    w_ref = None
    m_ref = None
    if has_w:
        w_ref = refs[idx]
        idx += 1
    if has_m:
        m_ref = refs[idx]
        idx += 1
    rowsum_out, denom_out = refs[idx], refs[idx + 1]
    rowsum_acc, denom_acc = refs[idx + 2], refs[idx + 3]

    k = pl.program_id(1)

    @pl.when(k == 0)
    def _init():
        rowsum_acc[...] = jnp.zeros_like(rowsum_acc)
        denom_acc[...] = jnp.zeros_like(denom_acc)

    pred = pred_ref[...].astype(jnp.float32)
    gt = gt_ref[...].astype(jnp.float32)

    # gt_copy = clamp(gt - 2*smooth, min=0) + smooth
    gt_c = jnp.maximum(gt - 2.0 * smooth, 0.0) + smooth

    # Fused sigmoid / log-sigmoid: one exp + one log (+ one divide) per element.
    #   p        = clamp(sigmoid(pred), 1e-8)
    #   log(p)   = -log(1 + exp(-pred))          clamped at log(1e-8)
    #   log(1-p) = -pred - log(1 + exp(-pred))   clamped at log(1e-8)
    t = jnp.exp(-pred)                       # may be +inf for very negative pred (handled by clamps)
    denom_s = 1.0 + t
    p = jnp.maximum(1.0 / denom_s, 1e-8)
    softplus_neg = jnp.log(denom_s)          # = -log(sigmoid(pred))
    log_p = jnp.maximum(-softplus_neg, _LOG_EPS)
    log_1mp = jnp.maximum(-pred - softplus_neg, _LOG_EPS)

    # Integer powers via multiplies (VPU), not exp/log (EUP).
    pos = pow_a(1.0 - p) * pow_b(gt_c) * log_p
    neg = pow_a(p) * pow_b(1.0 - gt_c) * log_1mp
    loss = -(pos + neg)

    w = None
    m = None
    if has_w:
        w = w_ref[...].astype(jnp.float32)
        loss = loss * w
    if has_m:
        m = m_ref[...].astype(jnp.float32)
        loss = loss * m

    rowsum_acc[...] += jnp.sum(loss).reshape(1, 1)
    if need_denom:
        if has_w and has_m:
            wm = w * m
        elif has_w:
            wm = w
        else:
            wm = m
        denom_acc[...] += jnp.sum(wm).reshape(1, 1)

    @pl.when(k == pl.num_programs(1) - 1)
    def _finalize():
        rowsum_out[...] = rowsum_acc[...].reshape(1, 1, 1)
        denom_out[...] = denom_acc[...].reshape(1, 1, 1)


def _pick_row_tile(num_rows, target_rows=2048):
    """Largest multiple-of-8 divisor of num_rows that is <= target (~1 MiB f32 per input block),
    or the full extent when it already fits / no divisor exists (full extent is always legal)."""
    if num_rows <= target_rows:
        return num_rows
    t = (target_rows // 8) * 8
    while t >= 8:
        if num_rows % t == 0:
            return t
        t -= 8
    return num_rows


def weighted_modified_focal_loss_with_sigmoid(pred, gt, weight=None, valid_masks=None,
                                              reduction='mean', smooth=0.0,
                                              alpha=2, beta=4, _row_tile=None):
    """JAX/Pallas equivalent of Weighted_ModifiedFocalLossWithSigmoid.forward."""
    if reduction not in ('none', 'mean', 'sum'):
        raise ValueError("Wrong mode for reduction")
    assert 0 <= smooth < 1, 'smooth value should be in [0,1]'
    assert pred.shape[0] == gt.shape[0]

    batch_size = pred.shape[0]
    hw = math.prod(pred.shape[1:]) if len(pred.shape) > 1 else 1
    pad = (-hw) % LANE
    num_rows = (hw + pad) // LANE

    # Kernel specialization flags (absent streams are never materialized/loaded, except that a
    # padding mask is forced when hw is not a multiple of 128 so padded lanes contribute zero).
    need_internal_mask = (pad > 0) and (valid_masks is None)
    has_w = weight is not None
    has_m = (valid_masks is not None) or need_internal_mask
    need_denom = (reduction == 'mean') and (has_w or (valid_masks is not None))

    def _prep(x):
        x2 = x.reshape(batch_size, hw)
        if pad:
            x2 = jnp.pad(x2, ((0, 0), (0, pad)))   # zero-pad (mask zeros kill padded lanes)
        return x2.reshape(batch_size, num_rows, LANE)

    inputs = [_prep(pred), _prep(gt)]          # original dtypes; cast to f32 inside the kernel
    if has_w:
        inputs.append(_prep(weight))
    if has_m:
        if valid_masks is not None:
            inputs.append(_prep(valid_masks))
        else:
            inputs.append(_prep(jnp.ones((batch_size, hw), jnp.float32).reshape(
                (batch_size,) + tuple(pred.shape[1:]))))

    if _row_tile is not None:
        assert num_rows % _row_tile == 0, "_row_tile must divide the row count"
        r_tile = _row_tile
    else:
        r_tile = _pick_row_tile(num_rows)
    k_steps = num_rows // r_tile

    kernel = functools.partial(
        _focal_loss_kernel,
        smooth=float(smooth),
        pow_a=_make_int_pow(alpha),
        pow_b=_make_int_pow(beta),
        has_w=has_w, has_m=has_m, need_denom=need_denom)

    tile_spec = pl.BlockSpec((1, r_tile, LANE), lambda b, k: (b, k, 0))
    out_spec = pl.BlockSpec((1, 1, 1), lambda b, k: (b, 0, 0))

    rowsum, denom = pl.pallas_call(
        kernel,
        out_shape=(jax.ShapeDtypeStruct((batch_size, 1, 1), jnp.float32),
                   jax.ShapeDtypeStruct((batch_size, 1, 1), jnp.float32)),
        grid_spec=pltpu.PrefetchScalarGridSpec(
            num_scalar_prefetch=0,
            grid=(batch_size, k_steps),
            in_specs=[tile_spec] * len(inputs),
            out_specs=(out_spec, out_spec),
            scratch_shapes=[pltpu.VMEM((1, 1), jnp.float32),
                            pltpu.VMEM((1, 1), jnp.float32)],
        ),
        compiler_params=pltpu.CompilerParams(
            dimension_semantics=("parallel", "arbitrary"),
            vmem_limit_bytes=32 * 1024 * 1024),
    )(*inputs)

    rowsum_b = rowsum[:, 0, 0]                  # per-batch sum of the (masked, weighted) loss

    if reduction == 'none':
        return rowsum_b / float(hw)             # loss.view(B, -1).mean(1)
    total = jnp.sum(rowsum_b)
    if reduction == 'sum':
        return total
    # 'mean'
    if weight is None and valid_masks is None:
        return jnp.minimum(total / float(batch_size * hw) * 10.0, 100.0)
    den = jnp.sum(denom[:, 0, 0])               # = sum(weight*mask) / sum(mask) / sum(weight)
    return jnp.minimum(total / jnp.maximum(den, 1e-8), 100.0)


def _reference(pred, gt, weight, valid_masks, reduction='mean', smooth=0.0,
               alpha=2, beta=4):
    """Plain-JAX reference mirroring the PyTorch forward (for sanity check)."""
    b = pred.shape[0]
    gt_c = jnp.maximum(gt - 2 * smooth, 0.0) + smooth
    p = jnp.maximum(jax.nn.sigmoid(pred), 1e-8)
    pos = (1 - p) ** alpha * gt_c ** beta * jnp.log(p)
    neg = p ** alpha * (1 - gt_c) ** beta * jnp.log(jnp.maximum(1 - p, 1e-8))
    loss = -(pos + neg) if weight is None else -weight * (pos + neg)
    if valid_masks is not None:
        loss = loss * valid_masks
    if reduction == 'none':
        return loss.reshape(b, -1).mean(1)
    if reduction == 'sum':
        return loss.sum()
    if weight is not None and valid_masks is not None:
        return jnp.minimum(loss.sum() / jnp.maximum((weight * valid_masks).sum(), 1e-8), 100.0)
    if weight is None and valid_masks is not None:
        return jnp.minimum(loss.sum() / jnp.maximum(valid_masks.sum(), 1e-8), 100.0)
    if weight is not None and valid_masks is None:
        return jnp.minimum(loss.sum() / jnp.maximum(weight.sum(), 1e-8), 100.0)
    return jnp.minimum(loss.mean() * 10.0, 100.0)


if __name__ == "__main__":
    key = jax.random.PRNGKey(0)
    k1, k2, k3, k4 = jax.random.split(key, 4)

    B, C, H, W = 2, 1, 16, 16                    # pred/gt/weight/mask: (batch, 1, H, W)
    pred = jax.random.normal(k1, (B, C, H, W), jnp.float32)
    gt = jax.random.uniform(k2, (B, C, H, W), jnp.float32)           # heatmap in [0,1)
    weight = jax.random.uniform(k3, (B, C, H, W), jnp.float32) + 0.5
    valid = (jax.random.uniform(k4, (B, C, H, W)) > 0.2).astype(jnp.float32)

    def check(out, ref, tag):
        out = jax.block_until_ready(out)
        assert jnp.allclose(out, ref, rtol=2e-5, atol=2e-5), (tag, out, ref)

    # Main case: reduction='mean' with weight and valid_masks.
    out = weighted_modified_focal_loss_with_sigmoid(
        pred, gt, weight=weight, valid_masks=valid, reduction='mean', smooth=0.0)
    check(out, _reference(pred, gt, weight, valid, 'mean', 0.0), 'mean/w/m')

    # Other reduction / presence branches (specialized kernels without ones-streams).
    for red, w_, m_, sm in [('none', None, None, 0.1), ('sum', weight, valid, 0.1),
                            ('mean', None, None, 0.1), ('mean', weight, None, 0.1),
                            ('mean', None, valid, 0.1), ('none', weight, valid, 0.0)]:
        o = weighted_modified_focal_loss_with_sigmoid(
            pred, gt, weight=w_, valid_masks=m_, reduction=red, smooth=sm)
        check(o, _reference(pred, gt, w_, m_, red, sm),
              f'{red}/w={w_ is not None}/m={m_ is not None}')

    # Multi-step reduction grid (exercises pl.when init/accumulate/finalize): R=16, tile=8 -> K=2.
    kp, kg, kw, km = jax.random.split(jax.random.PRNGKey(1), 4)
    shape2 = (2, 1, 32, 64)
    pred2 = jax.random.normal(kp, shape2, jnp.float32)
    gt2 = jax.random.uniform(kg, shape2, jnp.float32)
    w2 = jax.random.uniform(kw, shape2, jnp.float32) + 0.5
    m2 = (jax.random.uniform(km, shape2) > 0.3).astype(jnp.float32)
    o2 = weighted_modified_focal_loss_with_sigmoid(
        pred2, gt2, weight=w2, valid_masks=m2, reduction='mean', smooth=0.05, _row_tile=8)
    check(o2, _reference(pred2, gt2, w2, m2, 'mean', 0.05), 'tiled')

    # Non-multiple-of-128 spatial size (padding path with internal mask stream).
    kp3, kg3 = jax.random.split(jax.random.PRNGKey(2), 2)
    shape3 = (2, 1, 15, 15)
    pred3 = jax.random.normal(kp3, shape3, jnp.float32)
    gt3 = jax.random.uniform(kg3, shape3, jnp.float32)
    o3 = weighted_modified_focal_loss_with_sigmoid(pred3, gt3, reduction='mean', smooth=0.0)
    check(o3, _reference(pred3, gt3, None, None, 'mean', 0.0), 'padded')

    # bf16 pred fed straight to the kernel (no wrapper upcast; cast happens in VMEM).
    pred_bf = pred.astype(jnp.bfloat16)
    o4 = weighted_modified_focal_loss_with_sigmoid(
        pred_bf, gt, weight=weight, valid_masks=valid, reduction='mean', smooth=0.0)
    check(o4, _reference(pred_bf.astype(jnp.float32), gt, weight, valid, 'mean', 0.0), 'bf16')

    print("KERNEL_OK")
</pallas_src>

<mosaic_0001>
module attributes {stable_mosaic.version = 11 : i64} {
  func.func @_focal_loss_kernel(%arg0: i32, %arg1: i32, %arg2: memref<1x2x128xf32, #tpu.memory_space<vmem>>, %arg3: memref<1x2x128xf32, #tpu.memory_space<vmem>>, %arg4: memref<1x2x128xf32, #tpu.memory_space<vmem>>, %arg5: memref<1x2x128xf32, #tpu.memory_space<vmem>>, %arg6: memref<1x1x1xf32, #tpu.memory_space<vmem>>, %arg7: memref<1x1x1xf32, #tpu.memory_space<vmem>>, %arg8: memref<1x1xf32, #tpu.memory_space<vmem>>, %arg9: memref<1x1xf32, #tpu.memory_space<vmem>>) attributes {dimension_semantics = [#tpu.dimension_semantics<parallel>, #tpu.dimension_semantics<arbitrary>], iteration_bounds = array<i64: 2, 1>, scalar_prefetch = 0 : i64, scratch_operands = 2 : i64, tpu.core_type = #tpu.core_type<tc>, window_params = [{transform_indices = @transform_0, window_bounds = array<i64: 1, 2, 128>}, {transform_indices = @transform_1, window_bounds = array<i64: 1, 2, 128>}, {transform_indices = @transform_2, window_bounds = array<i64: 1, 2, 128>}, {transform_indices = @transform_3, window_bounds = array<i64: 1, 2, 128>}, {transform_indices = @transform_4, window_bounds = array<i64: 1, 1, 1>}, {transform_indices = @transform_5, window_bounds = array<i64: 1, 1, 1>}]} {
    %c0_i32 = arith.constant 0 : i32
    %0 = arith.cmpi eq, %arg1, %c0_i32 : i32
    %1 = arith.extui %0 : i1 to i32
    %c0_i32_0 = arith.constant 0 : i32
    %2 = arith.cmpi ne, %1, %c0_i32_0 : i32
    scf.if %2 {
      %cst_37 = arith.constant 0.000000e+00 : f32
      %71 = vector.broadcast %cst_37 : f32 to vector<1x1xf32>
      %c0_38 = arith.constant 0 : index
      %c0_39 = arith.constant 0 : index
      %72 = vector.load %arg8[%c0_38, %c0_39] : memref<1x1xf32, #tpu.memory_space<vmem>>, vector<1x1xf32>
      tpu.vector_store %arg8[%c0_38, %c0_39], %71 {strides = array<i32>} : memref<1x1xf32, #tpu.memory_space<vmem>>, vector<1x1xf32>,
      %cst_40 = arith.constant 0.000000e+00 : f32
      %73 = vector.broadcast %cst_40 : f32 to vector<1x1xf32>
      %c0_41 = arith.constant 0 : index
      %c0_42 = arith.constant 0 : index
      %74 = vector.load %arg9[%c0_41, %c0_42] : memref<1x1xf32, #tpu.memory_space<vmem>>, vector<1x1xf32>
      tpu.vector_store %arg9[%c0_41, %c0_42], %73 {strides = array<i32>} : memref<1x1xf32, #tpu.memory_space<vmem>>, vector<1x1xf32>,
    } else {
    }
    %c0 = arith.constant 0 : index
    %c0_1 = arith.constant 0 : index
    %c0_2 = arith.constant 0 : index
    %3 = vector.load %arg2[%c0, %c0_1, %c0_2] : memref<1x2x128xf32, #tpu.memory_space<vmem>>, vector<1x2x128xf32>
    %c0_3 = arith.constant 0 : index
    %c0_4 = arith.constant 0 : index
    %c0_5 = arith.constant 0 : index
    %4 = vector.load %arg3[%c0_3, %c0_4, %c0_5] : memref<1x2x128xf32, #tpu.memory_space<vmem>>, vector<1x2x128xf32>
    %cst = arith.constant 0.000000e+00 : f32
    %5 = vector.broadcast %cst : f32 to vector<1x2x128xf32>
    %6 = arith.subf %4, %5 : vector<1x2x128xf32>
    %cst_6 = arith.constant 0.000000e+00 : f32
    %7 = vector.broadcast %cst_6 : f32 to vector<1x2x128xf32>
    %8 = arith.maximumf %6, %7 : vector<1x2x128xf32>
    %cst_7 = arith.constant 0.000000e+00 : f32
    %9 = vector.broadcast %cst_7 : f32 to vector<1x2x128xf32>
    %10 = arith.addf %8, %9 : vector<1x2x128xf32>
    %cst_8 = arith.constant 0.000000e+00 : f32
    %11 = vector.broadcast %cst_8 : f32 to vector<1x2x128xf32>
    %12 = arith.subf %11, %3 : vector<1x2x128xf32>
    %13 = math.exp %12 : vector<1x2x128xf32>
    %cst_9 = arith.constant 1.000000e+00 : f32
    %14 = vector.broadcast %cst_9 : f32 to vector<1x2x128xf32>
    %15 = arith.addf %14, %13 : vector<1x2x128xf32>
    %cst_10 = arith.constant 1.000000e+00 : f32
    %16 = vector.broadcast %cst_10 : f32 to vector<1x2x128xf32>
    %17 = arith.divf %16, %15 : vector<1x2x128xf32>
    %cst_11 = arith.constant 9.99999993E-9 : f32
    %18 = vector.broadcast %cst_11 : f32 to vector<1x2x128xf32>
    %19 = arith.maximumf %17, %18 : vector<1x2x128xf32>
    %20 = math.log %15 : vector<1x2x128xf32>
    %cst_12 = arith.constant 0.000000e+00 : f32
    %21 = vector.broadcast %cst_12 : f32 to vector<1x2x128xf32>
    %22 = arith.subf %21, %20 : vector<1x2x128xf32>
    %cst_13 = arith.constant -18.420681 : f32
    %23 = vector.broadcast %cst_13 : f32 to vector<1x2x128xf32>
    %24 = arith.maximumf %22, %23 : vector<1x2x128xf32>
    %cst_14 = arith.constant 0.000000e+00 : f32
    %25 = vector.broadcast %cst_14 : f32 to vector<1x2x128xf32>
    %26 = arith.subf %25, %3 : vector<1x2x128xf32>
    %27 = arith.subf %26, %20 : vector<1x2x128xf32>
    %cst_15 = arith.constant -18.420681 : f32
    %28 = vector.broadcast %cst_15 : f32 to vector<1x2x128xf32>
    %29 = arith.maximumf %27, %28 : vector<1x2x128xf32>
    %cst_16 = arith.constant 1.000000e+00 : f32
    %30 = vector.broadcast %cst_16 : f32 to vector<1x2x128xf32>
    %31 = arith.subf %30, %19 : vector<1x2x128xf32>
    %32 = arith.mulf %31, %31 : vector<1x2x128xf32>
    %33 = arith.mulf %10, %10 : vector<1x2x128xf32>
    %34 = arith.mulf %33, %33 : vector<1x2x128xf32>
    %35 = arith.mulf %32, %34 : vector<1x2x128xf32>
    %36 = arith.mulf %35, %24 : vector<1x2x128xf32>
    %37 = arith.mulf %19, %19 : vector<1x2x128xf32>
    %cst_17 = arith.constant 1.000000e+00 : f32
    %38 = vector.broadcast %cst_17 : f32 to vector<1x2x128xf32>
    %39 = arith.subf %38, %10 : vector<1x2x128xf32>
    %40 = arith.mulf %39, %39 : vector<1x2x128xf32>
    %41 = arith.mulf %40, %40 : vector<1x2x128xf32>
    %42 = arith.mulf %37, %41 : vector<1x2x128xf32>
    %43 = arith.mulf %42, %29 : vector<1x2x128xf32>
    %44 = arith.addf %36, %43 : vector<1x2x128xf32>
    %cst_18 = arith.constant 0.000000e+00 : f32
    %45 = vector.broadcast %cst_18 : f32 to vector<1x2x128xf32>
    %46 = arith.subf %45, %44 : vector<1x2x128xf32>
    %c0_19 = arith.constant 0 : index
    %c0_20 = arith.constant 0 : index
    %c0_21 = arith.constant 0 : index
    %47 = vector.load %arg4[%c0_19, %c0_20, %c0_21] : memref<1x2x128xf32, #tpu.memory_space<vmem>>, vector<1x2x128xf32>
    %48 = arith.mulf %46, %47 : vector<1x2x128xf32>
    %c0_22 = arith.constant 0 : index
    %c0_23 = arith.constant 0 : index
    %c0_24 = arith.constant 0 : index
    %49 = vector.load %arg5[%c0_22, %c0_23, %c0_24] : memref<1x2x128xf32, #tpu.memory_space<vmem>>, vector<1x2x128xf32>
    %50 = arith.mulf %48, %49 : vector<1x2x128xf32>
    %c0_25 = arith.constant 0 : index
    %c0_26 = arith.constant 0 : index
    %51 = vector.load %arg8[%c0_25, %c0_26] : memref<1x1xf32, #tpu.memory_space<vmem>>, vector<1x1xf32>
    %52 = vector.shape_cast %50 : vector<1x2x128xf32> to vector<1x1x2x128xf32>
    %cst_27 = arith.constant dense<0.000000e+00> : vector<1xf32>
    %53 = vector.multi_reduction <add>, %52, %cst_27 [1, 2, 3] : vector<1x1x2x128xf32> to vector<1xf32>
    %54 = vector.shape_cast %53 : vector<1xf32> to vector<1x1x1x1xf32>
    %55 = vector.extract %54[0, 0, 0, 0] : f32 from vector<1x1x1x1xf32>
    %56 = vector.broadcast %55 : f32 to vector<1x1xf32>
    %57 = arith.addf %51, %56 : vector<1x1xf32>
    %c0_28 = arith.constant 0 : index
    %c0_29 = arith.constant 0 : index
    %58 = vector.load %arg8[%c0_28, %c0_29] : memref<1x1xf32, #tpu.memory_space<vmem>>, vector<1x1xf32>
    tpu.vector_store %arg8[%c0_28, %c0_29], %57 {strides = array<i32>} : memref<1x1xf32, #tpu.memory_space<vmem>>, vector<1x1xf32>,
    %59 = arith.mulf %47, %49 : vector<1x2x128xf32>
    %c0_30 = arith.constant 0 : index
    %c0_31 = arith.constant 0 : index
    %60 = vector.load %arg9[%c0_30, %c0_31] : memref<1x1xf32, #tpu.memory_space<vmem>>, vector<1x1xf32>
    %61 = vector.shape_cast %59 : vector<1x2x128xf32> to vector<1x1x2x128xf32>
    %cst_32 = arith.constant dense<0.000000e+00> : vector<1xf32>
    %62 = vector.multi_reduction <add>, %61, %cst_32 [1, 2, 3] : vector<1x1x2x128xf32> to vector<1xf32>
    %63 = vector.shape_cast %62 : vector<1xf32> to vector<1x1x1x1xf32>
    %64 = vector.extract %63[0, 0, 0, 0] : f32 from vector<1x1x1x1xf32>
    %65 = vector.broadcast %64 : f32 to vector<1x1xf32>
    %66 = arith.addf %60, %65 : vector<1x1xf32>
    %c0_33 = arith.constant 0 : index
    %c0_34 = arith.constant 0 : index
    %67 = vector.load %arg9[%c0_33, %c0_34] : memref<1x1xf32, #tpu.memory_space<vmem>>, vector<1x1xf32>
    tpu.vector_store %arg9[%c0_33, %c0_34], %66 {strides = array<i32>} : memref<1x1xf32, #tpu.memory_space<vmem>>, vector<1x1xf32>,
    %c0_i32_35 = arith.constant 0 : i32
    %68 = arith.cmpi eq, %arg1, %c0_i32_35 : i32
    %69 = arith.extui %68 : i1 to i32
    %c0_i32_36 = arith.constant 0 : i32
    %70 = arith.cmpi ne, %69, %c0_i32_36 : i32
    scf.if %70 {
      %c0_37 = arith.constant 0 : index
      %c0_38 = arith.constant 0 : index
      %71 = vector.load %arg8[%c0_37, %c0_38] : memref<1x1xf32, #tpu.memory_space<vmem>>, vector<1x1xf32>
      %72 = vector.shape_cast %71 : vector<1x1xf32> to vector<1x1x1xf32>
      %c0_39 = arith.constant 0 : index
      %c0_40 = arith.constant 0 : index
      %c0_41 = arith.constant 0 : index
      %73 = vector.load %arg6[%c0_39, %c0_40, %c0_41] : memref<1x1x1xf32, #tpu.memory_space<vmem>>, vector<1x1x1xf32>
      tpu.vector_store %arg6[%c0_39, %c0_40, %c0_41], %72 {strides = array<i32>} : memref<1x1x1xf32, #tpu.memory_space<vmem>>, vector<1x1x1xf32>,
      %c0_42 = arith.constant 0 : index
      %c0_43 = arith.constant 0 : index
      %74 = vector.load %arg9[%c0_42, %c0_43] : memref<1x1xf32, #tpu.memory_space<vmem>>, vector<1x1xf32>
      %75 = vector.shape_cast %74 : vector<1x1xf32> to vector<1x1x1xf32>
      %c0_44 = arith.constant 0 : index
      %c0_45 = arith.constant 0 : index
      %c0_46 = arith.constant 0 : index
      %76 = vector.load %arg7[%c0_44, %c0_45, %c0_46] : memref<1x1x1xf32, #tpu.memory_space<vmem>>, vector<1x1x1xf32>
      tpu.vector_store %arg7[%c0_44, %c0_45, %c0_46], %75 {strides = array<i32>} : memref<1x1x1xf32, #tpu.memory_space<vmem>>, vector<1x1x1xf32>,
    } else {
    }
    return
  }
  func.func @transform_0(%arg0: i32, %arg1: i32) -> (i32, i32, i32) {
    %c0_i32 = arith.constant 0 : i32
    %c0_i32_0 = arith.constant 0 : i32
    return %arg0, %arg1, %c0_i32 : i32, i32, i32
  }
  func.func @transform_1(%arg0: i32, %arg1: i32) -> (i32, i32, i32) {
    %c0_i32 = arith.constant 0 : i32
    %c0_i32_0 = arith.constant 0 : i32
    return %arg0, %arg1, %c0_i32 : i32, i32, i32
  }
  func.func @transform_2(%arg0: i32, %arg1: i32) -> (i32, i32, i32) {
    %c0_i32 = arith.constant 0 : i32
    %c0_i32_0 = arith.constant 0 : i32
    return %arg0, %arg1, %c0_i32 : i32, i32, i32
  }
  func.func @transform_3(%arg0: i32, %arg1: i32) -> (i32, i32, i32) {
    %c0_i32 = arith.constant 0 : i32
    %c0_i32_0 = arith.constant 0 : i32
    return %arg0, %arg1, %c0_i32 : i32, i32, i32
  }
  func.func @transform_4(%arg0: i32, %arg1: i32) -> (i32, i32, i32) {
    %c0_i32 = arith.constant 0 : i32
    %c0_i32_0 = arith.constant 0 : i32
    %c0_i32_1 = arith.constant 0 : i32
    return %arg0, %c0_i32, %c0_i32_0 : i32, i32, i32
  }
  func.func @transform_5(%arg0: i32, %arg1: i32) -> (i32, i32, i32) {
    %c0_i32 = arith.constant 0 : i32
    %c0_i32_0 = arith.constant 0 : i32
    %c0_i32_1 = arith.constant 0 : i32
    return %arg0, %c0_i32, %c0_i32_0 : i32, i32, i32
  }
}

</mosaic_0001>

<llo_original>
// kernel: tpu_custom_call.1
$region0: #{tpu_custom_call.1}
  #allocation0 [shape = 'u32[]', space=smem, size = 0x4, offset = 0x4, fixed_abs, tag = 'smem constant byte address 0x4 - core index']
  #allocation1 [shape = 'u32[144,128]{1,0:T(1,128)}', space=vmem, size = 0x12000, scoped, tag = 'internal scratch']
  #allocation2 [shape = 'f32[1,1]{1,0:T(1,128)}', space=vmem, size = 0x200, scoped, tag = 'scratch operand']
  #allocation3 [shape = 'f32[1,1]{1,0:T(1,128)}', space=vmem, size = 0x200, scoped, tag = 'scratch operand']
  %s0 = inlined_call_operand.hbm [shape: f32[2,2,128], index: 0, kind: input, shape index: {}]
  %s1 = inlined_call_operand.hbm [shape: f32[2,2,128], index: 1, kind: input, shape index: {}]
  %s2 = inlined_call_operand.hbm [shape: f32[2,2,128], index: 2, kind: input, shape index: {}]
  %s3 = inlined_call_operand.vmem [shape: f32[2,2,128], index: 3, kind: input, shape index: {}]
  %s4 = inlined_call_operand.vmem [shape: f32[2,1,1], index: 4, kind: output, shape index: {0}]
  %s5 = inlined_call_operand.vmem [shape: f32[2,1,1], index: 5, kind: output, shape index: {1}]
  %6 = xla_tuple %s4, %s5
  %s7 = sld [smem:[#allocation0]]
  $region77: #{tpu_custom_call.1} parent=0
    _
  %s9 = ssub.s32 1, %s7
  %s10 = scalar_select 0, %s9, %s7
  $region1: #{tpu_custom_call.1} parent=0
    #allocation4 [shape = 'u8[2048]{0}', space=vmem, size = 0x800, scoped, tag = 'input window, operand 0']
    #allocation5 [shape = 's32[2]{0}', space=sflag, size = 0x8, scoped, tag = 'scoped memory for tpu_custom_call.1']
    #allocation6 [shape = 'u8[2048]{0}', space=vmem, size = 0x800, scoped, tag = 'input window, operand 1']
    #allocation7 [shape = 's32[2]{0}', space=sflag, size = 0x8, scoped, tag = 'scoped memory for tpu_custom_call.1']
    #allocation8 [shape = 'u8[2048]{0}', space=vmem, size = 0x800, scoped, tag = 'input window, operand 2']
    %11 = vsyncpa [#allocation5], 0
    %s12 = scalar_lea.sflag [#allocation5], 1
    %13 = vsyncpa %s12, 0
    %14 = vsyncpa [#allocation7], 0
    %s15 = scalar_lea.sflag [#allocation7], 1
    %16 = vsyncpa %s15, 0
    loop: start=0, step=1, limit=4
    $region2: #{tpu_custom_call.1} parent=1 // loop_pre_header
      _
    $region3: #{tpu_custom_call.1} parent=1 // loop_header
      %s18 = sphi 0, %s22
      %p19 = scmp.ge.s32.totalorder %s18, 4
      %s25 = sphi 0, %s37
      %s26 = sphi 0, %s33
      %s27 = sphi 0, %s25
      %s28 = sphi 0, %s26
      %s29 = sphi 0, %s27
      %s30 = sphi 0, %s28
      %s42 = sphi 0, %s44
      %s45 = sphi 0, %s42
      %s46 = sphi 0, %s45
      %s62 = sphi 0, %s46
      %s70 = sphi 0, %s72
      %s73 = sphi 0, %s70
      %s74 = sphi 0, %s73
      %s90 = sphi 0, %s74
      %s98 = sphi 0, %s100
      %s101 = sphi 0, %s98
      %s102 = sphi 0, %s101
      %s118 = sphi 0, %s102
      %s126 = sphi 0, %s128
      %s129 = sphi 0, %s126
      %s130 = sphi 0, %s129
      %s146 = sphi 0, %s130
      %s152 = sphi 0, %s154
      %s155 = sphi 0, %s152
      %s156 = sphi 0, %s155
      %s172 = sphi 0, %s156
      %s178 = sphi 0, %s180
      %s181 = sphi 0, %s178
      %s182 = sphi 0, %s181
      %s198 = sphi 0, %s182
    $region4: #{tpu_custom_call.1} parent=1 // loop_header_branch
      %21 = sbr.rel (%p19) target = $region8
    $region5: #{tpu_custom_call.1} parent=1 // loop_body
      %s23 = ssub.s32 %s18, 1
      %s24 = ssub.s32 %s18, 2
      %s31 = sadd.s32 1, %s26
      %p32 = scmp.ge.s32.totalorder %s31, 1
      %s33 = scalar_select %p32, 0, %s31
      %s34 = sadd.s32 1, %s25
      %s35 = scalar_select %p32, %s34, %s25
      %p36 = scmp.ge.s32.totalorder %s35, 2
      %s37 = scalar_select %p36, 0, %s35
      %s38 = ssub.s32 %s25, %s37
      %s39 = ssub.s32 %s26, %s33
      %s40 = sor.u32 %s38, %s39
      %p41 = scmp.eq.s32.totalorder %s40, 0
      %s43 = sadd.s32 %s42, 1
      %s44 = scalar_select %p41, %s42, %s43
      %p47 = pneg %p41
      %p48 = scmp.eq.s32.totalorder %s18, 1
      %p49 = por %p47, %p48
      %p50 = scmp.ne.s32.totalorder %s42, %s45
      %p51 = scmp.eq.s32.totalorder %s18, 0
      %p52 = por %p50, %p51
      %p53 = scmp.ne.s32.totalorder %s42, %s45
      %p54 = scmp.eq.s32.totalorder %s23, 1
      %p55 = por %p53, %p54
      %p56 = scmp.ne.s32.totalorder %s45, %s46
      %p57 = scmp.eq.s32.totalorder %s23, 0
      %p58 = por %p56, %p57
      %p59 = scmp.ne.s32.totalorder %s45, %s46
      %p60 = scmp.eq.s32.totalorder %s24, 1
      %p61 = por %p59, %p60
      %p63 = scmp.ne.s32.totalorder %s46, %s62
      %p64 = scmp.eq.s32.totalorder %s24, 0
      %p65 = por %p63, %p64
      %s66 = ssub.s32 %s25, %s37
      %s67 = ssub.s32 %s26, %s33
      %s68 = sor.u32 %s66, %s67
      %p69 = scmp.eq.s32.totalorder %s68, 0
      %s71 = sadd.s32 %s70, 1
      %s72 = scalar_select %p69, %s70, %s71
      %p75 = pneg %p69
      %p76 = scmp.eq.s32.totalorder %s18, 1
      %p77 = por %p75, %p76
      %p78 = scmp.ne.s32.totalorder %s70, %s73
      %p79 = scmp.eq.s32.totalorder %s18, 0
      %p80 = por %p78, %p79
      %p81 = scmp.ne.s32.totalorder %s70, %s73
      %p82 = scmp.eq.s32.totalorder %s23, 1
      %p83 = por %p81, %p82
      %p84 = scmp.ne.s32.totalorder %s73, %s74
      %p85 = scmp.eq.s32.totalorder %s23, 0
      %p86 = por %p84, %p85
      %p87 = scmp.ne.s32.totalorder %s73, %s74
      %p88 = scmp.eq.s32.totalorder %s24, 1
      %p89 = por %p87, %p88
      %p91 = scmp.ne.s32.totalorder %s74, %s90
      %p92 = scmp.eq.s32.totalorder %s24, 0
      %p93 = por %p91, %p92
      %s94 = ssub.s32 %s25, %s37
      %s95 = ssub.s32 %s26, %s33
      %s96 = sor.u32 %s94, %s95
      %p97 = scmp.eq.s32.totalorder %s96, 0
      %s99 = sadd.s32 %s98, 1
      %s100 = scalar_select %p97, %s98, %s99
      %p103 = pneg %p97
      %p104 = scmp.eq.s32.totalorder %s18, 1
      %p105 = por %p103, %p104
      %p106 = scmp.ne.s32.totalorder %s98, %s101
      %p107 = scmp.eq.s32.totalorder %s18, 0
      %p108 = por %p106, %p107
      %p109 = scmp.ne.s32.totalorder %s98, %s101
      %p110 = scmp.eq.s32.totalorder %s23, 1
      %p111 = por %p109, %p110
      %p112 = scmp.ne.s32.totalorder %s101, %s102
      %p113 = scmp.eq.s32.totalorder %s23, 0
      %p114 = por %p112, %p113
      %p115 = scmp.ne.s32.totalorder %s101, %s102
      %p116 = scmp.eq.s32.totalorder %s24, 1
      %p117 = por %p115, %p116
      %p119 = scmp.ne.s32.totalorder %s102, %s118
      %p120 = scmp.eq.s32.totalorder %s24, 0
      %p121 = por %p119, %p120
      %s122 = ssub.s32 %s25, %s37
      %s123 = ssub.s32 %s26, %s33
      %s124 = sor.u32 %s122, %s123
      %p125 = scmp.eq.s32.totalorder %s124, 0
      %s127 = sadd.s32 %s126, 1
      %s128 = scalar_select %p125, %s126, %s127
      %p131 = pneg %p125
      %p132 = scmp.eq.s32.totalorder %s18, 1
      %p133 = por %p131, %p132
      %p134 = scmp.ne.s32.totalorder %s126, %s129
      %p135 = scmp.eq.s32.totalorder %s18, 0
      %p136 = por %p134, %p135
      %p137 = scmp.ne.s32.totalorder %s126, %s129
      %p138 = scmp.eq.s32.totalorder %s23, 1
      %p139 = por %p137, %p138
      %p140 = scmp.ne.s32.totalorder %s129, %s130
      %p141 = scmp.eq.s32.totalorder %s23, 0
      %p142 = por %p140, %p141
      %p143 = scmp.ne.s32.totalorder %s129, %s130
      %p144 = scmp.eq.s32.totalorder %s24, 1
      %p145 = por %p143, %p144
      %p147 = scmp.ne.s32.totalorder %s130, %s146
      %p148 = scmp.eq.s32.totalorder %s24, 0
      %p149 = por %p147, %p148
      %s150 = ssub.s32 %s25, %s37
      %p151 = scmp.eq.s32.totalorder %s150, 0
      %s153 = sadd.s32 %s152, 1
      %s154 = scalar_select %p151, %s152, %s153
      %p157 = pneg %p151
      %p158 = scmp.eq.s32.totalorder %s18, 1
      %p159 = por %p157, %p158
      %p160 = scmp.ne.s32.totalorder %s152, %s155
      %p161 = scmp.eq.s32.totalorder %s18, 0
      %p162 = por %p160, %p161
      %p163 = scmp.ne.s32.totalorder %s152, %s155
      %p164 = scmp.eq.s32.totalorder %s23, 1
      %p165 = por %p163, %p164
      %p166 = scmp.ne.s32.totalorder %s155, %s156
      %p167 = scmp.eq.s32.totalorder %s23, 0
      %p168 = por %p166, %p167
      %p169 = scmp.ne.s32.totalorder %s155, %s156
      %p170 = scmp.eq.s32.totalorder %s24, 1
      %p171 = por %p169, %p170
      %p173 = scmp.ne.s32.totalorder %s156, %s172
      %p174 = scmp.eq.s32.totalorder %s24, 0
      %p175 = por %p173, %p174
      %s176 = ssub.s32 %s25, %s37
      %p177 = scmp.eq.s32.totalorder %s176, 0
      %s179 = sadd.s32 %s178, 1
      %s180 = scalar_select %p177, %s178, %s179
      %p183 = pneg %p177
      %p184 = scmp.eq.s32.totalorder %s18, 1
      %p185 = por %p183, %p184
      %p186 = scmp.ne.s32.totalorder %s178, %s181
      %p187 = scmp.eq.s32.totalorder %s18, 0
      %p188 = por %p186, %p187
      %p189 = scmp.ne.s32.totalorder %s178, %s181
      %p190 = scmp.eq.s32.totalorder %s23, 1
      %p191 = por %p189, %p190
      %p192 = scmp.ne.s32.totalorder %s181, %s182
      %p193 = scmp.eq.s32.totalorder %s23, 0
      %p194 = por %p192, %p193
      %p195 = scmp.ne.s32.totalorder %s181, %s182
      %p196 = scmp.eq.s32.totalorder %s24, 1
      %p197 = por %p195, %p196
      %p199 = scmp.ne.s32.totalorder %s182, %s198
      %p200 = scmp.eq.s32.totalorder %s24, 0
      %p201 = por %p199, %p200
      %p202 = scmp.le.s32.totalorder 1, %s18
      %p203 = scmp.lt.s32.totalorder %s18, 3
      %p204 = pnand %p202, %p203
      %p205 = pneg %p204
      // Predicated region
      $region9: #{tpu_custom_call.1} parent=5 // pred_check
        _
      $region10: #{tpu_custom_call.1} parent=5 // pred_check_branch
        %207 = sbr.rel (%p204) target = $region12
      $region11: #{tpu_custom_call.1} parent=5 // pred_region
        %s208 = ssub.s32 %s18, 1
      $region12: #{tpu_custom_call.1} parent=5 // pred_fallthru
        _
      %p209 = scmp.lt.s32.totalorder %s18, 2
      // Predicated region
      $region13: #{tpu_custom_call.1} parent=5 // pred_check
        %p210 = pneg %p209
      $region14: #{tpu_custom_call.1} parent=5 // pred_check_branch
        %212 = sbr.rel (%p210) target = $region16
      $region15: #{tpu_custom_call.1} parent=5 // pred_region
        // Predicated region
        $region17: #{tpu_custom_call.1} parent=15 // pred_check
          %p213 = pneg %p52
        $region18: #{tpu_custom_call.1} parent=15 // pred_check_branch
          %215 = sbr.rel (%p213) target = $region20
        $region19: #{tpu_custom_call.1} parent=15 // pred_region
          %s216 = sand.u32 %s42, 1
          %s217 = scalar_lea.sflag [#allocation5], %s216
          %s218 = sand.u32 %s42, 1
          %s219 = smul.addr %s218, 2
          %s220 = scalar_lea.vmem [#allocation4], %s219
          %s222 = ssub.s32 32, 32
          %223 = vsyncadd %s217, %s222
          %s224 = sadd.s32 %s26, %s25
          %s225 = smul.addr %s224, 32
          %s226 = scalar_lea.hbm %s0, %s225
          %s228 = sshll.u32 %s220, 4
          %s229 = int_to_ptr.vmem [resolvable:$true] %s228
          %231 = dma.hbm_to_vmem [thread:$0]  %s226, 32, %s229, %s217
        $region20: #{tpu_custom_call.1} parent=15 // pred_fallthru
          _
        // Predicated region
        $region21: #{tpu_custom_call.1} parent=15 // pred_check
          %p232 = pneg %p80
        $region22: #{tpu_custom_call.1} parent=15 // pred_check_branch
          %234 = sbr.rel (%p232) target = $region24
        $region23: #{tpu_custom_call.1} parent=15 // pred_region
          %s235 = sand.u32 %s18, 1
          %s236 = scalar_lea.sflag [#allocation7], %s235
          %s237 = sand.u32 %s70, 1
          %s238 = smul.addr %s237, 2
          %s239 = scalar_lea.vmem [#allocation6], %s238
          %s241 = ssub.s32 32, 32
          %242 = vsyncadd %s236, %s241
          %s243 = sadd.s32 %s26, %s25
          %s244 = smul.addr %s243, 32
          %s245 = scalar_lea.hbm %s1, %s244
          %s247 = sshll.u32 %s239, 4
          %s248 = int_to_ptr.vmem [resolvable:$true] %s247
          %250 = dma.hbm_to_vmem [thread:$0]  %s245, 32, %s248, %s236
        $region24: #{tpu_custom_call.1} parent=15 // pred_fallthru
          _
        // Predicated region
        $region25: #{tpu_custom_call.1} parent=15 // pred_check
          %p251 = pneg %p108
        $region26: #{tpu_custom_call.1} parent=15 // pred_check_branch
          %253 = sbr.rel (%p251) target = $region28
        $region27: #{tpu_custom_call.1} parent=15 // pred_region
          %s254 = sand.u32 %s18, 1
          %s255 = scalar_lea.sflag [#allocation7], %s254
          %s256 = sand.u32 %s98, 1
          %s257 = smul.addr %s256, 2
          %s258 = scalar_lea.vmem [#allocation8], %s257
          %s260 = ssub.s32 32, 32
          %261 = vsyncadd %s255, %s260
          %s262 = sadd.s32 %s26, %s25
          %s263 = smul.addr %s262, 32
          %s264 = scalar_lea.hbm %s2, %s263
          %s266 = sshll.u32 %s258, 4
          %s267 = int_to_ptr.vmem [resolvable:$true] %s266
          %269 = dma.hbm_to_vmem [thread:$0]  %s264, 32, %s267, %s255
        $region28: #{tpu_custom_call.1} parent=15 // pred_fallthru
          _
        // Predicated region
        $region29: #{tpu_custom_call.1} parent=15 // pred_check
          %p270 = pneg %p136
        $region30: #{tpu_custom_call.1} parent=15 // pred_check_branch
          %272 = sbr.rel (%p270) target = $region32
        $region31: #{tpu_custom_call.1} parent=15 // pred_region
          %p273 = scmp.lt.s32.totalorder %s25, 1
          %s274 = scalar_select %p273, %s25, 1
          %p275 = scmp.lt.s32.totalorder %s26, 0
          %s276 = scalar_select %p275, %s26, 0
          %s277 = sadd.s32 %s276, %s274
          %s278 = smul.addr %s277, 2
          %s279 = scalar_lea.vmem %s3, %s278
        $region32: #{tpu_custom_call.1} parent=15 // pred_fallthru
          _
      $region16: #{tpu_custom_call.1} parent=5 // pred_fallthru
        _
      %p280 = scmp.le.s32.totalorder 1, %s18
      %p281 = scmp.lt.s32.totalorder %s18, 3
      %p282 = pnand %p280, %p281
      %p283 = pneg %p282
      // Predicated region
      $region33: #{tpu_custom_call.1} parent=5 // pred_check
        _
      $region34: #{tpu_custom_call.1} parent=5 // pred_check_branch
        %285 = sbr.rel (%p282) target = $region36
      $region35: #{tpu_custom_call.1} parent=5 // pred_region
        %s286 = ssub.s32 %s18, 1
        %s287 = sand.u32 %s45, 1
        %s288 = scalar_lea.sflag [#allocation5], %s287
        %s289 = sand.u32 %s45, 1
        %s290 = smul.addr %s289, 2
        %s291 = scalar_lea.vmem [#allocation4], %s290
        // Predicated region
        $region37: #{tpu_custom_call.1} parent=35 // pred_check
          %p292 = pneg %p58
        $region38: #{tpu_custom_call.1} parent=35 // pred_check_branch
          %294 = sbr.rel (%p292) target = $region40
        $region39: #{tpu_custom_call.1} parent=35 // pred_region
          %295 = dma.done %s288, 32
        $region40: #{tpu_custom_call.1} parent=35 // pred_fallthru
          _
        %s296 = sand.u32 %s23, 1
        %s297 = scalar_lea.sflag [#allocation7], %s296
        %s298 = sand.u32 %s73, 1
        %s299 = smul.addr %s298, 2
        %s300 = scalar_lea.vmem [#allocation6], %s299
        // Predicated region
        $region41: #{tpu_custom_call.1} parent=35 // pred_check
          %p301 = pneg %p86
        $region42: #{tpu_custom_call.1} parent=35 // pred_check_branch
          %303 = sbr.rel (%p301) target = $region44
        $region43: #{tpu_custom_call.1} parent=35 // pred_region
          %304 = dma.done %s297, 32
        $region44: #{tpu_custom_call.1} parent=35 // pred_fallthru
          _
        %s305 = sand.u32 %s23, 1
        %s306 = scalar_lea.sflag [#allocation7], %s305
        %s307 = sand.u32 %s101, 1
        %s308 = smul.addr %s307, 2
        %s309 = scalar_lea.vmem [#allocation8], %s308
        // Predicated region
        $region45: #{tpu_custom_call.1} parent=35 // pred_check
          %p310 = pneg %p114
        $region46: #{tpu_custom_call.1} parent=35 // pred_check_branch
          %312 = sbr.rel (%p310) target = $region48
        $region47: #{tpu_custom_call.1} parent=35 // pred_region
          %313 = dma.done %s306, 32
        $region48: #{tpu_custom_call.1} parent=35 // pred_fallthru
          _
        %s314 = sand.u32 %s45, 1
        %s315 = scalar_lea.sflag [#allocation5], %s314
        %s316 = sand.u32 %s45, 1
        %s317 = smul.addr %s316, 2
        %s318 = scalar_lea.vmem [#allocation4], %s317
        %p319 = pneg %p58
        %p320 = pneg %p55
        %s321 = sand.u32 %s23, 1
        %s322 = scalar_lea.sflag [#allocation7], %s321
        %s323 = sand.u32 %s73, 1
        %s324 = smul.addr %s323, 2
        %s325 = scalar_lea.vmem [#allocation6], %s324
        %p326 = pneg %p86
        %p327 = pneg %p83
        %s328 = sand.u32 %s23, 1
        %s329 = scalar_lea.sflag [#allocation7], %s328
        %s330 = sand.u32 %s101, 1
        %s331 = smul.addr %s330, 2
        %s332 = scalar_lea.vmem [#allocation8], %s331
        %p333 = pneg %p114
        %p334 = pneg %p111
        %p335 = scmp.lt.s32.totalorder %s27, 1
        %s336 = scalar_select %p335, %s27, 1
        %p337 = scmp.lt.s32.totalorder %s28, 0
        %s338 = scalar_select %p337, %s28, 0
        %s339 = sadd.s32 %s338, %s336
        %s340 = smul.addr %s339, 2
        %s341 = scalar_lea.vmem %s3, %s340
        %p342 = pneg %p142
        %p343 = pneg %p139
        %p344 = pneg %p168
        %p345 = pneg %p165
        %p346 = scmp.lt.s32.totalorder %s27, 1
        %s347 = scalar_select %p346, %s27, 1
        %s348 = scalar_lea.vmem %s4, %s347
        %p349 = pneg %p194
        %p350 = pneg %p191
        %p351 = scmp.lt.s32.totalorder %s27, 1
        %s352 = scalar_select %p351, %s27, 1
        %s353 = scalar_lea.vmem %s5, %s352
        %p354 = scmp.lt.s32.totalorder %s27, 1
        %s355 = scalar_select %p354, %s27, 1
        %p356 = scmp.lt.s32.totalorder %s28, 0
        %s357 = scalar_select %p356, %s28, 0
        %s358 = sadd.s32 %s357, %s355
        %s359 = smul.addr %s358, 2
        %s360 = scalar_lea.vmem %s3, %s359
        %p361 = scmp.lt.s32.totalorder %s27, 1
        %s362 = scalar_select %p361, %s27, 1
        %s363 = scalar_lea.vmem %s4, %s362
        %p364 = scmp.lt.s32.totalorder %s27, 1
        %s365 = scalar_select %p364, %s27, 1
        %s366 = scalar_lea.vmem %s5, %s365
        %p367 = scmp.eq.s32.totalorder %s28, 0
        // Predicated region
        $region49: #{tpu_custom_call.1} parent=35 // pred_check
          %p368 = pneg %p367
        $region50: #{tpu_custom_call.1} parent=35 // pred_check_branch
          %370 = sbr.rel (%p368) target = $region52
        $region51: #{tpu_custom_call.1} parent=35 // pred_region
          %vm371 = vcmask 0
          %372 = vst.msk [vmem:[#allocation2] sm:$0x1] %vm371, 0.0
          %373 = vst.msk [vmem:[#allocation3] sm:$0x1] %vm371, 0.0
        $region52: #{tpu_custom_call.1} parent=35 // pred_fallthru
          _
        %v374 = vld [vmem:[%s291] sm:$0x3]
        %v375 = vld [vmem:[%s300] sm:$0x3]
        %v376 = vmax.f32 %v375, 0.0
        %v377 = vadd.f32 %v376, 0.0
        %v378 = vsub.f32 0.0, %v374
        %v379 = vmul.f32 %v378, 1.442695
        %v380 = vpow.pop %v379
        %v381 = vadd.f32 %v380, 1.0
        %v382 = vrcp.pop %v381
        %v383 = vmul.f32 1.0, %v382
        %v384 = vmax.f32 %v383, 1e-08
        %v385 = vlog2.pop %v381
        %v386 = vmul.f32 %v385, 0.6931472
        %v387 = vsub.f32 0.0, %v386
        %v388 = vmax.f32 %v387, -18.420681
        %v389 = vsub.f32 %v378, %v386
        %v390 = vmax.f32 %v389, -18.420681
        %v391 = vsub.f32 1.0, %v384
        %v392 = vmul.f32 %v391, %v391
        %v393 = vmul.f32 %v377, %v377
        %v394 = vmul.f32 %v393, %v393
        %v395 = vmul.f32 %v392, %v394
        %v396 = vmul.f32 %v395, %v388
        %v397 = vmul.f32 %v384, %v384
        %v398 = vsub.f32 1.0, %v377
        %v399 = vmul.f32 %v398, %v398
        %v400 = vmul.f32 %v399, %v399
        %v401 = vmul.f32 %v397, %v400
        %v402 = vmul.f32 %v401, %v390
        %v403 = vadd.f32 %v396, %v402
        %v404 = vsub.f32 0.0, %v403
        %v405 = vld [vmem:[%s309] sm:$0x3]
        %v406 = vmul.f32 %v404, %v405
        %v407 = vld [vmem:[%s360] sm:$0x3]
        %v408 = vmul.f32 %v406, %v407
        %v409 = vld [vmem:[#allocation2] sm:$0x1]
        %vm410 = vcmask 1041408
        %v411 = vsel %vm410, %v408, 0.0
        %412 = vadd.xlane.f32.xlu0 %v411
        %v413 = vpop.xlane.xlu0 %412
        %v414 = vrot.slane %v413, 4
        %v415 = vadd.f32 %v413, %v414
        %v416 = vrot.slane %v415, 2
        %v417 = vadd.f32 %v415, %v416
        %v418 = vrot.slane %v417, 1
        %v419 = vadd.f32 %v417, %v418
        %s420 = vtos %v419
        %v421 = vstv %s420
        %v422 = vadd.f32 %v409, %v421
        %vm423 = vcmask 0
        %424 = vst.msk [vmem:[#allocation2] sm:$0x1] %vm423, %v422
        %v425 = vmul.f32 %v405, %v407
        %v426 = vld [vmem:[#allocation3] sm:$0x1]
        %v427 = vsel %vm410, %v425, 0.0
        %428 = vadd.xlane.f32.xlu0 %v427
        %v429 = vpop.xlane.xlu0 %428
        %v430 = vrot.slane %v429, 4
        %v431 = vadd.f32 %v429, %v430
        %v432 = vrot.slane %v431, 2
        %v433 = vadd.f32 %v431, %v432
        %v434 = vrot.slane %v433, 1
        %v435 = vadd.f32 %v433, %v434
        %s436 = vtos %v435
        %v437 = vstv %s436
        %v438 = vadd.f32 %v426, %v437
        %439 = vst.msk [vmem:[#allocation3] sm:$0x1] %vm423, %v438
        // Predicated region
        $region53: #{tpu_custom_call.1} parent=35 // pred_check
          %p440 = pneg %p367
        $region54: #{tpu_custom_call.1} parent=35 // pred_check_branch
          %442 = sbr.rel (%p440) target = $region56
        $region55: #{tpu_custom_call.1} parent=35 // pred_region
          %v443 = vld [vmem:[#allocation2] sm:$0x1]
          %444 = vst.msk [vmem:[%s363] sm:$0x1] %vm423, %v443
          %v445 = vld [vmem:[#allocation3] sm:$0x1]
          %446 = vst.msk [vmem:[%s366] sm:$0x1] %vm423, %v445
        $region56: #{tpu_custom_call.1} parent=35 // pred_fallthru
          _
        %p447 = scmp.lt.s32.totalorder %s27, 1
        %s448 = scalar_select %p447, %s27, 1
        %s449 = scalar_lea.vmem %s4, %s448
        %p450 = scmp.lt.s32.totalorder %s27, 1
        %s451 = scalar_select %p450, %s27, 1
        %s452 = scalar_lea.vmem %s5, %s451
        // Predicated region
        $region57: #{tpu_custom_call.1} parent=35 // pred_check
          %p453 = pneg %p165
        $region58: #{tpu_custom_call.1} parent=35 // pred_check_branch
          %455 = sbr.rel (%p453) target = $region60
        $region59: #{tpu_custom_call.1} parent=35 // pred_region
          _
        $region60: #{tpu_custom_call.1} parent=35 // pred_fallthru
          _
        // Predicated region
        $region61: #{tpu_custom_call.1} parent=35 // pred_check
          %p456 = pneg %p191
        $region62: #{tpu_custom_call.1} parent=35 // pred_check_branch
          %458 = sbr.rel (%p456) target = $region64
        $region63: #{tpu_custom_call.1} parent=35 // pred_region
          _
        $region64: #{tpu_custom_call.1} parent=35 // pred_fallthru
          _
      $region36: #{tpu_custom_call.1} parent=5 // pred_fallthru
        _
      %p459 = scmp.le.s32.totalorder 2, %s18
      // Predicated region
      $region65: #{tpu_custom_call.1} parent=5 // pred_check
        %p460 = pneg %p459
      $region66: #{tpu_custom_call.1} parent=5 // pred_check_branch
        %462 = sbr.rel (%p460) target = $region68
      $region67: #{tpu_custom_call.1} parent=5 // pred_region
        %s463 = ssub.s32 %s18, 2
        // Predicated region
        $region69: #{tpu_custom_call.1} parent=67 // pred_check
          %p464 = pneg %p171
        $region70: #{tpu_custom_call.1} parent=67 // pred_check_branch
          %466 = sbr.rel (%p464) target = $region72
        $region71: #{tpu_custom_call.1} parent=67 // pred_region
          %p467 = scmp.lt.s32.totalorder %s29, 1
          %s468 = scalar_select %p467, %s29, 1
          %s469 = scalar_lea.vmem %s4, %s468
        $region72: #{tpu_custom_call.1} parent=67 // pred_fallthru
          _
        // Predicated region
        $region73: #{tpu_custom_call.1} parent=67 // pred_check
          %p470 = pneg %p197
        $region74: #{tpu_custom_call.1} parent=67 // pred_check_branch
          %472 = sbr.rel (%p470) target = $region76
        $region75: #{tpu_custom_call.1} parent=67 // pred_region
          %p473 = scmp.lt.s32.totalorder %s29, 1
          %s474 = scalar_select %p473, %s29, 1
          %s475 = scalar_lea.vmem %s5, %s474
        $region76: #{tpu_custom_call.1} parent=67 // pred_fallthru
          _
      $region68: #{tpu_custom_call.1} parent=5 // pred_fallthru
        _
    $region6: #{tpu_custom_call.1} parent=1 // loop_footer
      %s22 = sadd.s32 1, %s18
    $region7: #{tpu_custom_call.1} parent=1 // loop_footer_branch
      %17 = sbr.rel target = $region3
    $region8: #{tpu_custom_call.1} parent=1 // loop_exit
      _
    %476 = vsyncpa [#allocation5], 1
    %s477 = scalar_lea.sflag [#allocation5], 1
    %478 = vsyncpa %s477, 1
    %479 = vsyncpa [#allocation7], 1
    %s480 = scalar_lea.sflag [#allocation7], 1
    %481 = vsyncpa %s480, 1

</llo_original>
